<compile_context>
chip_gen: v5e
topology: v5e:2x2
jax: 0.10.0
libtpu: 0.0.40
codegen_flags: <defaults>
</compile_context>

<pallas_src>
import functools

import jax
import jax.numpy as jnp
from jax.experimental import pallas as pl
from jax.experimental.pallas import tpu as pltpu


D_IN = 200    # input features (spectrum length)
D_HID = 512   # hidden width
D_OUT = 2     # outputs (oxidation state, CN)


def spec2state_kernel(x_ref, w1_ref, b1_ref, w2t_ref, b2_ref, o_ref):
    # Layer 1: cast the x tile to bf16 on the VPU, bf16 MXU matmul with f32
    # accumulation, bias + ReLU in f32.
    x_bf16 = x_ref[...].astype(jnp.bfloat16)                              # (tb, 200)
    h = jnp.dot(x_bf16, w1_ref[...], preferred_element_type=jnp.float32)  # (tb, 512) f32
    h = jnp.maximum(h + b1_ref[...], 0.0)
    # Layer 2, transposed (flash-attention-style contraction over the last dims):
    # (2, 512) . (tb, 512) -> (2, tb). Output stays lane-dense along the batch dim
    # and there is no padded-column MXU work. Kept in f32 (tiny), so no h cast pass.
    out_t = jax.lax.dot_general(
        w2t_ref[...], h,
        dimension_numbers=(((1,), (1,)), ((), ())),
        preferred_element_type=jnp.float32)                               # (2, tb) f32
    o_ref[...] = (out_t + b2_ref[...]).astype(o_ref.dtype)


def _round_up(n, m):
    return ((n + m - 1) // m) * m


def _choose_batch_tile(B, block_b):
    if B <= block_b:
        # Single full-extent tile: both block dims equal the array dims, so no
        # padding and no out-of-bounds rows/columns at all.
        return B
    # Multi-tile: tile must be a multiple of 128 (output last dim is the batch).
    # Balance tiles so the padded fraction of the last block stays small.
    n_tiles = pl.cdiv(B, block_b)
    return _round_up(pl.cdiv(B, n_tiles), 128)


@functools.partial(jax.jit, static_argnames=("block_b",))
def spec2state_forward(x, w1_bf16, b1_row, w2_t, b2_col, *, block_b=1024):
    """x: (B, 200) f32; prepared params from prepare_params(); returns (B, 2) f32."""
    B = x.shape[0]
    tb = _choose_batch_tile(B, block_b)

    cost = pl.CostEstimate(
        flops=2 * B * (D_IN * D_HID + D_HID * D_OUT),
        transcendentals=0,
        bytes_accessed=(x.size * 4 + w1_bf16.size * 2 + b1_row.size * 4
                        + w2_t.size * 4 + b2_col.size * 4 + D_OUT * B * 4),
    )

    out_t = pl.pallas_call(
        spec2state_kernel,
        out_shape=jax.ShapeDtypeStruct((D_OUT, B), jnp.float32),
        grid=(pl.cdiv(B, tb),),
        in_specs=[
            pl.BlockSpec((tb, D_IN), lambda i: (i, 0)),      # x tile, pipelined over batch
            pl.BlockSpec((D_IN, D_HID), lambda i: (0, 0)),   # W1 (bf16), VMEM-resident
            pl.BlockSpec((1, D_HID), lambda i: (0, 0)),      # b1, resident
            pl.BlockSpec((D_OUT, D_HID), lambda i: (0, 0)),  # W2^T (f32), resident
            pl.BlockSpec((D_OUT, 1), lambda i: (0, 0)),      # b2, resident
        ],
        out_specs=pl.BlockSpec((D_OUT, tb), lambda i: (0, i)),
        compiler_params=pltpu.CompilerParams(
            # TODO(synk): on v7x, verify in the profile that the batch axis actually
            # shards across both TensorCores; if one TC is idle, switch this to
            # pltpu.CORE_PARALLEL (no effect on v5e/v6e which have 1 TC).
            dimension_semantics=("parallel",),
        ),
        cost_estimate=cost,
    )(x, w1_bf16, b1_row, w2_t, b2_col)

    return out_t.T  # (B, 2); tiny (8 B/row) transpose in the wrapper


def init_params(key):
    """Parameter shapes matching nn.Linear(200,512) / nn.Linear(512,2).

    PyTorch stores weight as (out, in); we keep the transposed (in, out) layout so the
    hot path is x @ W (identical semantics to x @ W.T with the PyTorch layout).
    """
    k1, k2, k3, k4 = jax.random.split(key, 4)
    bound1 = 1.0 / (D_IN ** 0.5)
    bound2 = 1.0 / (D_HID ** 0.5)
    w1 = jax.random.uniform(k1, (D_IN, D_HID), jnp.float32, -bound1, bound1)
    b1 = jax.random.uniform(k2, (D_HID,), jnp.float32, -bound1, bound1)
    w2 = jax.random.uniform(k3, (D_HID, D_OUT), jnp.float32, -bound2, bound2)
    b2 = jax.random.uniform(k4, (D_OUT,), jnp.float32, -bound2, bound2)
    return w1, b1, w2, b2


def prepare_params(w1, b1, w2, b2):
    """One-time parameter prep, hoisted out of the per-call forward:
    bf16 W1 for the MXU, transposed (2, 512) W2 for the lane-dense output,
    biases reshaped to their broadcast layouts."""
    w1_bf16 = w1.astype(jnp.bfloat16)                     # (200, 512) bf16
    b1_row = b1.reshape(1, D_HID).astype(jnp.float32)     # (1, 512) f32
    w2_t = w2.T.astype(jnp.float32)                       # (2, 512) f32
    b2_col = b2.reshape(D_OUT, 1).astype(jnp.float32)     # (2, 1) f32
    return w1_bf16, b1_row, w2_t, b2_col


def _ref_f32(x, w1, b1, w2, b2):
    hp = jax.lax.Precision.HIGHEST
    h = jnp.maximum(jnp.dot(x, w1, precision=hp) + b1, 0.0)
    return jnp.dot(h, w2, precision=hp) + b2


def _ref_bf16_emulated(x, w1, b1, w2, b2):
    # Emulates the kernel's numerics: bf16 x / W1 with f32 accumulation,
    # f32 bias + ReLU, f32 layer 2.
    hp = jax.lax.Precision.HIGHEST
    xb = x.astype(jnp.bfloat16).astype(jnp.float32)
    w1b = w1.astype(jnp.bfloat16).astype(jnp.float32)
    h = jnp.maximum(jnp.dot(xb, w1b, precision=hp) + b1, 0.0)
    return jnp.dot(h, w2.astype(jnp.float32), precision=hp) + b2


if __name__ == "__main__":
    key = jax.random.PRNGKey(0)
    k_params, k_x1, k_x2 = jax.random.split(key, 3)

    w1, b1, w2, b2 = init_params(k_params)
    params = prepare_params(w1, b1, w2, b2)

    # Small batch (8 spectra, 200 features each) — single full-extent tile.
    x_small = jax.random.normal(k_x1, (8, D_IN), jnp.float32)
    out_small = jax.block_until_ready(spec2state_forward(x_small, *params))
    assert out_small.shape == (8, D_OUT)
    assert jnp.allclose(out_small, _ref_bf16_emulated(x_small, w1, b1, w2, b2),
                        atol=2e-3, rtol=2e-3)
    assert jnp.allclose(out_small, _ref_f32(x_small, w1, b1, w2, b2),
                        atol=5e-2, rtol=5e-2)

    # Non-multiple-of-8 batch, still a single full-extent tile (no padding at all).
    x_big = jax.random.normal(k_x2, (300, D_IN), jnp.float32)
    out_big = jax.block_until_ready(spec2state_forward(x_big, *params))
    assert out_big.shape == (300, D_OUT)
    assert jnp.allclose(out_big, _ref_bf16_emulated(x_big, w1, b1, w2, b2),
                        atol=2e-3, rtol=2e-3)
    assert jnp.allclose(out_big, _ref_f32(x_big, w1, b1, w2, b2),
                        atol=5e-2, rtol=5e-2)

    # Same batch with a small block_b to force the multi-tile path
    # (128-aligned tiles + masked boundary block). Results must match exactly-ish.
    out_tiled = jax.block_until_ready(
        spec2state_forward(x_big, *params, block_b=128))
    assert out_tiled.shape == (300, D_OUT)
    assert jnp.allclose(out_tiled, out_big, atol=1e-6, rtol=0.0)

    print("KERNEL_OK")
</pallas_src>

<mosaic_0001>
module attributes {stable_mosaic.version = 11 : i64} {
  func.func @spec2state_kernel(%arg0: i32, %arg1: memref<8x200xf32, #tpu.memory_space<vmem>>, %arg2: memref<200x512xbf16, #tpu.memory_space<vmem>>, %arg3: memref<1x512xf32, #tpu.memory_space<vmem>>, %arg4: memref<2x512xf32, #tpu.memory_space<vmem>>, %arg5: memref<2x1xf32, #tpu.memory_space<vmem>>, %arg6: memref<2x8xf32, #tpu.memory_space<vmem>>) attributes {dimension_semantics = [#tpu.dimension_semantics<parallel>], iteration_bounds = array<i64: 1>, scalar_prefetch = 0 : i64, scratch_operands = 0 : i64, tpu.core_type = #tpu.core_type<tc>, window_params = [{transform_indices = @transform_0, window_bounds = array<i64: 8, 200>}, {pipeline_mode = #tpu.pipeline_mode<synchronous>, transform_indices = @transform_1, window_bounds = array<i64: 200, 512>}, {pipeline_mode = #tpu.pipeline_mode<synchronous>, transform_indices = @transform_2, window_bounds = array<i64: 1, 512>}, {pipeline_mode = #tpu.pipeline_mode<synchronous>, transform_indices = @transform_3, window_bounds = array<i64: 2, 512>}, {pipeline_mode = #tpu.pipeline_mode<synchronous>, transform_indices = @transform_4, window_bounds = array<i64: 2, 1>}, {transform_indices = @transform_5, window_bounds = array<i64: 2, 8>}]} {
    %c0 = arith.constant 0 : index
    %c0_0 = arith.constant 0 : index
    %0 = vector.load %arg1[%c0, %c0_0] : memref<8x200xf32, #tpu.memory_space<vmem>>, vector<8x200xf32>
    %1 = arith.truncf %0 : vector<8x200xf32> to vector<8x200xbf16>
    %c0_1 = arith.constant 0 : index
    %c0_2 = arith.constant 0 : index
    %2 = vector.load %arg2[%c0_1, %c0_2] : memref<200x512xbf16, #tpu.memory_space<vmem>>, vector<200x512xbf16>
    %cst = arith.constant dense<0.000000e+00> : vector<8x512xf32>
    %3 = tpu.matmul %1, %2, %cst {dimension_numbers = #tpu.dot_dimension_numbers<[1], [0], [0], [1], [0, 0, 1, 1], [], []>} : vector<8x200xbf16>, vector<200x512xbf16>, vector<8x512xf32> -> vector<8x512xf32>
    %c0_3 = arith.constant 0 : index
    %c0_4 = arith.constant 0 : index
    %4 = vector.load %arg3[%c0_3, %c0_4] : memref<1x512xf32, #tpu.memory_space<vmem>>, vector<1x512xf32>
    %5 = vector.broadcast %4 : vector<1x512xf32> to vector<8x512xf32>
    %6 = arith.addf %3, %5 : vector<8x512xf32>
    %cst_5 = arith.constant 0.000000e+00 : f32
    %7 = vector.broadcast %cst_5 : f32 to vector<8x512xf32>
    %8 = arith.maximumf %6, %7 : vector<8x512xf32>
    %c0_6 = arith.constant 0 : index
    %c0_7 = arith.constant 0 : index
    %9 = vector.load %arg4[%c0_6, %c0_7] : memref<2x512xf32, #tpu.memory_space<vmem>>, vector<2x512xf32>
    %cst_8 = arith.constant dense<0.000000e+00> : vector<2x8xf32>
    %10 = tpu.matmul %9, %8, %cst_8 {dimension_numbers = #tpu.dot_dimension_numbers<[1], [1], [0], [0], [0, 0, 1, 0], [], []>} : vector<2x512xf32>, vector<8x512xf32>, vector<2x8xf32> -> vector<2x8xf32>
    %c0_9 = arith.constant 0 : index
    %c0_10 = arith.constant 0 : index
    %11 = vector.load %arg5[%c0_9, %c0_10] : memref<2x1xf32, #tpu.memory_space<vmem>>, vector<2x1xf32>
    %12 = vector.broadcast %11 : vector<2x1xf32> to vector<2x8xf32>
    %13 = arith.addf %10, %12 : vector<2x8xf32>
    %c0_11 = arith.constant 0 : index
    %c0_12 = arith.constant 0 : index
    %14 = vector.load %arg6[%c0_11, %c0_12] : memref<2x8xf32, #tpu.memory_space<vmem>>, vector<2x8xf32>
    tpu.vector_store %arg6[%c0_11, %c0_12], %13 {strides = array<i32>} : memref<2x8xf32, #tpu.memory_space<vmem>>, vector<2x8xf32>,
    return
  }
  func.func @transform_0(%arg0: i32) -> (i32, i32) {
    %c0_i32 = arith.constant 0 : i32
    %c0_i32_0 = arith.constant 0 : i32
    return %arg0, %c0_i32 : i32, i32
  }
  func.func @transform_1(%arg0: i32) -> (i32, i32) {
    %c0_i32 = arith.constant 0 : i32
    %c0_i32_0 = arith.constant 0 : i32
    %c0_i32_1 = arith.constant 0 : i32
    return %c0_i32, %c0_i32_0 : i32, i32
  }
  func.func @transform_2(%arg0: i32) -> (i32, i32) {
    %c0_i32 = arith.constant 0 : i32
    %c0_i32_0 = arith.constant 0 : i32
    %c0_i32_1 = arith.constant 0 : i32
    return %c0_i32, %c0_i32_0 : i32, i32
  }
  func.func @transform_3(%arg0: i32) -> (i32, i32) {
    %c0_i32 = arith.constant 0 : i32
    %c0_i32_0 = arith.constant 0 : i32
    %c0_i32_1 = arith.constant 0 : i32
    return %c0_i32, %c0_i32_0 : i32, i32
  }
  func.func @transform_4(%arg0: i32) -> (i32, i32) {
    %c0_i32 = arith.constant 0 : i32
    %c0_i32_0 = arith.constant 0 : i32
    %c0_i32_1 = arith.constant 0 : i32
    return %c0_i32, %c0_i32_0 : i32, i32
  }
  func.func @transform_5(%arg0: i32) -> (i32, i32) {
    %c0_i32 = arith.constant 0 : i32
    %c0_i32_0 = arith.constant 0 : i32
    return %c0_i32, %arg0 : i32, i32
  }
}

</mosaic_0001>

<llo_original>
// kernel: spec2state_forward.1
$region0: #{spec2state_forward.1}
  #allocation0 [shape = 'u32[]', space=smem, size = 0x4, offset = 0x4, fixed_abs, tag = 'smem constant byte address 0x4 - core index']
  #allocation1 [shape = 'u32[72,128]{1,0:T(1,128)}', space=vmem, size = 0x9000, scoped, tag = 'internal scratch']
  %s0 = inlined_call_operand.hbm [shape: f32[8,200], index: 0, kind: input, shape index: {}]
  %s1 = inlined_call_operand.hbm [shape: bf16[200,512], index: 1, kind: input, shape index: {}]
  %s2 = inlined_call_operand.vmem [shape: f32[1,512], index: 2, kind: input, shape index: {}]
  %s3 = inlined_call_operand.hbm [shape: f32[2,512], index: 3, kind: input, shape index: {}]
  %s4 = inlined_call_operand.vmem [shape: f32[2,1], index: 4, kind: input, shape index: {}]
  %s5 = inlined_call_operand.hbm [shape: f32[2,8], index: 5, kind: output, shape index: {}]
  %s6 = sld [smem:[#allocation0]]
  $region42: #{spec2state_forward.1} parent=0
    _
  %s8 = ssub.s32 1, %s6
  %s9 = scalar_select 0, %s8, %s6
  $region1: #{spec2state_forward.1} parent=0
    #allocation2 [shape = 'u8[8192]{0}', space=vmem, size = 0x2000, scoped, tag = 'input window, operand 0, single buffered']
    #allocation3 [shape = 's32[1]{0}', space=sflag, size = 0x4, scoped, tag = 'scoped memory for spec2state_forward.1']
    #allocation4 [shape = 's32[1]{0}', space=sflag, size = 0x4, scoped, tag = 'scoped memory for spec2state_forward.1']
    #allocation5 [shape = 'u8[204800]{0}', space=vmem, size = 0x32000, scoped, tag = 'input window, operand 1, single buffered']
    #allocation6 [shape = 's32[1]{0}', space=sflag, size = 0x4, scoped, tag = 'scoped memory for spec2state_forward.1']
    #allocation7 [shape = 'u8[4096]{0}', space=vmem, size = 0x1000, scoped, tag = 'input window, operand 3, single buffered']
    #allocation8 [shape = 'u8[1024]{0}', space=vmem, size = 0x400, scoped, tag = 'output window, operand 0, single buffered']
    %10 = vsyncpa [#allocation3], 0
    %11 = vsyncpa [#allocation6], 0
    %12 = vsyncpa [#allocation4], 0
    // Predicated region
    $region2: #{spec2state_forward.1} parent=1 // pred_check
      _
    $region3: #{spec2state_forward.1} parent=1 // pred_check_branch
      %14 = sbr.rel (0) target = $region5
    $region4: #{spec2state_forward.1} parent=1 // pred_region
      %16 = vsyncadd [#allocation3], 0
      %s18 = sshll.u32 %s0, 4
      %s19 = int_to_ptr.hbm [resolvable:$true] %s18
      %s20 = sshll.u32 [#allocation2], 4
      %s21 = int_to_ptr.vmem [resolvable:$true] %s20
      %23 = dma.hbm_to_vmem [thread:$0]  %s19, 256, %s21, [#allocation3]
    $region5: #{spec2state_forward.1} parent=1 // pred_fallthru
      _
    // Predicated region
    $region6: #{spec2state_forward.1} parent=1 // pred_check
      _
    $region7: #{spec2state_forward.1} parent=1 // pred_check_branch
      %25 = sbr.rel (0) target = $region9
    $region8: #{spec2state_forward.1} parent=1 // pred_region
      %27 = vsyncadd [#allocation6], 0
      %s28 = sshll.u32 %s1, 4
      %s29 = int_to_ptr.hbm [resolvable:$true] %s28
      %s30 = sshll.u32 [#allocation5], 4
      %s31 = int_to_ptr.vmem [resolvable:$true] %s30
      %36 = dma.hbm_to_vmem [thread:$0]  %s29, 6400, %s31, [#allocation6], 256, 256, 16
    $region9: #{spec2state_forward.1} parent=1 // pred_fallthru
      _
    // Predicated region
    $region10: #{spec2state_forward.1} parent=1 // pred_check
      _
    $region11: #{spec2state_forward.1} parent=1 // pred_check_branch
      %38 = sbr.rel (0) target = $region13
    $region12: #{spec2state_forward.1} parent=1 // pred_region
      _
    $region13: #{spec2state_forward.1} parent=1 // pred_fallthru
      _
    // Predicated region
    $region14: #{spec2state_forward.1} parent=1 // pred_check
      _
    $region15: #{spec2state_forward.1} parent=1 // pred_check_branch
      %40 = sbr.rel (0) target = $region17
    $region16: #{spec2state_forward.1} parent=1 // pred_region
      %42 = vsyncadd [#allocation6], 0
      %s44 = sshll.u32 %s3, 4
      %s45 = int_to_ptr.hbm [resolvable:$true] %s44
      %s46 = sshll.u32 [#allocation7], 4
      %s47 = int_to_ptr.vmem [resolvable:$true] %s46
      %49 = dma.hbm_to_vmem [thread:$0]  %s45, 128, %s47, [#allocation6]
    $region17: #{spec2state_forward.1} parent=1 // pred_fallthru
      _
    // Predicated region
    $region18: #{spec2state_forward.1} parent=1 // pred_check
      _
    $region19: #{spec2state_forward.1} parent=1 // pred_check_branch
      %51 = sbr.rel (0) target = $region21
    $region20: #{spec2state_forward.1} parent=1 // pred_region
      _
    $region21: #{spec2state_forward.1} parent=1 // pred_fallthru
      _
    // Predicated region
    $region22: #{spec2state_forward.1} parent=1 // pred_check
      _
    $region23: #{spec2state_forward.1} parent=1 // pred_check_branch
      %53 = sbr.rel (0) target = $region25
    $region24: #{spec2state_forward.1} parent=1 // pred_region
      %55 = dma.done [#allocation3], 256
    $region25: #{spec2state_forward.1} parent=1 // pred_fallthru
      _
    // Predicated region
    $region26: #{spec2state_forward.1} parent=1 // pred_check
      _
    $region27: #{spec2state_forward.1} parent=1 // pred_check_branch
      %57 = sbr.rel (0) target = $region29
    $region28: #{spec2state_forward.1} parent=1 // pred_region
      %59 = dma.done [#allocation6], 6400
    $region29: #{spec2state_forward.1} parent=1 // pred_fallthru
      _
    // Predicated region
    $region30: #{spec2state_forward.1} parent=1 // pred_check
      _
    $region31: #{spec2state_forward.1} parent=1 // pred_check_branch
      %61 = sbr.rel (0) target = $region33
    $region32: #{spec2state_forward.1} parent=1 // pred_region
      %63 = dma.done [#allocation6], 128
    $region33: #{spec2state_forward.1} parent=1 // pred_fallthru
      _
    %v65 = vld [vmem:[#allocation2] sm:$0xff]
    %v66 = vld [vmem:[#allocation2 + $0x8] sm:$0xff]
    %v67 = vpack.c.bf16 %v65, %v65
    %v68 = vpack.c.bf16 %v66, %v66
    %v69 = vld [vmem:[#allocation5] sm:$0xff]
    %v70 = vld [vmem:[#allocation5 + $0x8] sm:$0xff]
    %v71 = vld [vmem:[#allocation5 + $0x10] sm:$0xff]
    %v72 = vld [vmem:[#allocation5 + $0x18] sm:$0xff]
    %v73 = vld [vmem:[#allocation5 + $0x20] sm:$0xff]
    %v74 = vld [vmem:[#allocation5 + $0x28] sm:$0xff]
    %v75 = vld [vmem:[#allocation5 + $0x30] sm:$0xff]
    %v76 = vld [vmem:[#allocation5 + $0x38] sm:$0xff]
    %v77 = vld [vmem:[#allocation5 + $0x40] sm:$0xff]
    %v78 = vld [vmem:[#allocation5 + $0x48] sm:$0xff]
    %v79 = vld [vmem:[#allocation5 + $0x50] sm:$0xff]
    %v80 = vld [vmem:[#allocation5 + $0x58] sm:$0xff]
    %v81 = vld [vmem:[#allocation5 + $0x60] sm:$0xff]
    %v82 = vld [vmem:[#allocation5 + $0x68] sm:$0xff]
    %v83 = vld [vmem:[#allocation5 + $0x70] sm:$0xff]
    %v84 = vld [vmem:[#allocation5 + $0x78] sm:$0xff]
    %v85 = vld [vmem:[#allocation5 + $0x80] sm:$0xff]
    %v86 = vld [vmem:[#allocation5 + $0x88] sm:$0xff]
    %v87 = vld [vmem:[#allocation5 + $0x90] sm:$0xff]
    %v88 = vld [vmem:[#allocation5 + $0x98] sm:$0xff]
    %v89 = vld [vmem:[#allocation5 + $0xa0] sm:$0xff]
    %v90 = vld [vmem:[#allocation5 + $0xa8] sm:$0xff]
    %v91 = vld [vmem:[#allocation5 + $0xb0] sm:$0xff]
    %v92 = vld [vmem:[#allocation5 + $0xb8] sm:$0xff]
    %v93 = vld [vmem:[#allocation5 + $0xc0] sm:$0xff]
    %v94 = vld [vmem:[#allocation5 + $0xc8] sm:$0xff]
    %v95 = vld [vmem:[#allocation5 + $0xd0] sm:$0xff]
    %v96 = vld [vmem:[#allocation5 + $0xd8] sm:$0xff]
    %v97 = vld [vmem:[#allocation5 + $0xe0] sm:$0xff]
    %v98 = vld [vmem:[#allocation5 + $0xe8] sm:$0xff]
    %v99 = vld [vmem:[#allocation5 + $0xf0] sm:$0xff]
    %v100 = vld [vmem:[#allocation5 + $0xf8] sm:$0xff]
    %v101 = vld [vmem:[#allocation5 + $0x100] sm:$0xff]
    %v102 = vld [vmem:[#allocation5 + $0x108] sm:$0xff]
    %v103 = vld [vmem:[#allocation5 + $0x110] sm:$0xff]
    %v104 = vld [vmem:[#allocation5 + $0x118] sm:$0xff]
    %v105 = vld [vmem:[#allocation5 + $0x120] sm:$0xff]
    %v106 = vld [vmem:[#allocation5 + $0x128] sm:$0xff]
    %v107 = vld [vmem:[#allocation5 + $0x130] sm:$0xff]
    %v108 = vld [vmem:[#allocation5 + $0x138] sm:$0xff]
    %v109 = vld [vmem:[#allocation5 + $0x140] sm:$0xff]
    %v110 = vld [vmem:[#allocation5 + $0x148] sm:$0xff]
    %v111 = vld [vmem:[#allocation5 + $0x150] sm:$0xff]
    %v112 = vld [vmem:[#allocation5 + $0x158] sm:$0xff]
    %v113 = vld [vmem:[#allocation5 + $0x160] sm:$0xff]
    %v114 = vld [vmem:[#allocation5 + $0x168] sm:$0xff]
    %v115 = vld [vmem:[#allocation5 + $0x170] sm:$0xff]
    %v116 = vld [vmem:[#allocation5 + $0x178] sm:$0xff]
    %v117 = vld [vmem:[#allocation5 + $0x180] sm:$0xff]
    %v118 = vld [vmem:[#allocation5 + $0x188] sm:$0xff]
    %v119 = vld [vmem:[%s2] sm:$0xf]
    %v121 = vperm.slane %v119, 0
    %v122 = vperm.slane %v119, 1
    %v123 = vperm.slane %v119, 2
    %v124 = vperm.slane %v119, 3
    %v179 = vunpack.c.l.b16 %v69
    %v180 = vunpack.c.h.b16 %v69
    %v181 = vunpack.c.l.b16 %v70
    %v182 = vunpack.c.h.b16 %v70
    %v183 = vunpack.c.l.b16 %v71
    %v184 = vunpack.c.h.b16 %v71
    %v185 = vunpack.c.l.b16 %v72
    %v186 = vunpack.c.h.b16 %v72
    %v187 = vunpack.c.l.b16 %v73
    %v188 = vunpack.c.h.b16 %v73
    %v189 = vunpack.c.l.b16 %v74
    %v190 = vunpack.c.h.b16 %v74
    %v191 = vunpack.c.l.b16 %v75
    %v192 = vunpack.c.h.b16 %v75
    %v193 = vunpack.c.l.b16 %v76
    %v194 = vunpack.c.h.b16 %v76
    %v195 = vunpack.c.l.b16 %v77
    %v196 = vunpack.c.h.b16 %v77
    %v197 = vunpack.c.l.b16 %v78
    %v198 = vunpack.c.h.b16 %v78
    %v199 = vunpack.c.l.b16 %v79
    %v200 = vunpack.c.h.b16 %v79
    %v201 = vunpack.c.l.b16 %v80
    %v202 = vunpack.c.h.b16 %v80
    %v203 = vunpack.c.l.b16 %v81
    %v204 = vunpack.c.h.b16 %v81
    %v205 = vunpack.c.l.b16 %v82
    %v206 = vunpack.c.h.b16 %v82
    %v207 = vunpack.c.l.b16 %v83
    %v208 = vunpack.c.h.b16 %v83
    %v209 = vunpack.c.l.b16 %v84
    %v210 = vunpack.c.h.b16 %v84
    %v211 = vunpack.c.l.b16 %v85
    %v212 = vunpack.c.h.b16 %v85
    %v213 = vunpack.c.l.b16 %v86
    %v214 = vunpack.c.h.b16 %v86
    %v215 = vunpack.c.l.b16 %v87
    %v216 = vunpack.c.h.b16 %v87
    %v217 = vunpack.c.l.b16 %v88
    %v218 = vunpack.c.h.b16 %v88
    %v219 = vunpack.c.l.b16 %v89
    %v220 = vunpack.c.h.b16 %v89
    %v221 = vunpack.c.l.b16 %v90
    %v222 = vunpack.c.h.b16 %v90
    %v223 = vunpack.c.l.b16 %v91
    %v224 = vunpack.c.h.b16 %v91
    %v225 = vunpack.c.l.b16 %v92
    %v226 = vunpack.c.h.b16 %v92
    %v227 = vunpack.c.l.b16 %v93
    %v228 = vunpack.c.h.b16 %v93
    %v229 = vunpack.c.l.b16 %v94
    %v230 = vunpack.c.h.b16 %v94
    %v231 = vunpack.c.l.b16 %v95
    %v232 = vunpack.c.h.b16 %v95
    %v233 = vunpack.c.l.b16 %v96
    %v234 = vunpack.c.h.b16 %v96
    %v235 = vunpack.c.l.b16 %v97
    %v236 = vunpack.c.h.b16 %v97
    %v237 = vunpack.c.l.b16 %v98
    %v238 = vunpack.c.h.b16 %v98
    %v239 = vunpack.c.l.b16 %v99
    %v240 = vunpack.c.h.b16 %v99
    %v241 = vunpack.c.l.b16 %v100
    %v242 = vunpack.c.h.b16 %v100
    %v243 = vunpack.c.l.b16 %v101
    %v244 = vunpack.c.h.b16 %v101
    %v245 = vunpack.c.l.b16 %v102
    %v246 = vunpack.c.h.b16 %v102
    %v247 = vunpack.c.l.b16 %v103
    %v248 = vunpack.c.h.b16 %v103
    %v249 = vunpack.c.l.b16 %v104
    %v250 = vunpack.c.h.b16 %v104
    %v251 = vunpack.c.l.b16 %v105
    %v252 = vunpack.c.h.b16 %v105
    %v253 = vunpack.c.l.b16 %v106
    %v254 = vunpack.c.h.b16 %v106
    %v255 = vunpack.c.l.b16 %v107
    %v256 = vunpack.c.h.b16 %v107
    %v257 = vunpack.c.l.b16 %v108
    %v258 = vunpack.c.h.b16 %v108
    %v259 = vunpack.c.l.b16 %v109
    %v260 = vunpack.c.h.b16 %v109
    %v261 = vunpack.c.l.b16 %v110
    %v262 = vunpack.c.h.b16 %v110
    %v263 = vunpack.c.l.b16 %v111
    %v264 = vunpack.c.h.b16 %v111
    %v265 = vunpack.c.l.b16 %v112
    %v266 = vunpack.c.h.b16 %v112
    %v267 = vunpack.c.l.b16 %v113
    %v268 = vunpack.c.h.b16 %v113
    %v269 = vunpack.c.l.b16 %v114
    %v270 = vunpack.c.h.b16 %v114
    %v271 = vunpack.c.l.b16 %v115
    %v272 = vunpack.c.h.b16 %v115
    %v273 = vunpack.c.l.b16 %v116
    %v274 = vunpack.c.h.b16 %v116
    %v275 = vunpack.c.l.b16 %v117
    %v276 = vunpack.c.h.b16 %v117
    %v277 = vunpack.c.l.b16 %v118
    %v278 = vunpack.c.h.b16 %v118
    %v279 = vpack.c.b16 %v183, %v179
    %v280 = vpack.c.b16 %v184, %v180
    %v281 = vpack.c.b16 %v185, %v181
    %v282 = vpack.c.b16 %v186, %v182
    %v283 = vpack.c.b16 %v191, %v187
    %v284 = vpack.c.b16 %v192, %v188
    %v285 = vpack.c.b16 %v193, %v189
    %v286 = vpack.c.b16 %v194, %v190
    %v287 = vpack.c.b16 %v199, %v195
    %v288 = vpack.c.b16 %v200, %v196
    %v289 = vpack.c.b16 %v201, %v197
    %v290 = vpack.c.b16 %v202, %v198
    %v291 = vpack.c.b16 %v207, %v203
    %v292 = vpack.c.b16 %v208, %v204
    %v293 = vpack.c.b16 %v209, %v205
    %v294 = vpack.c.b16 %v210, %v206
    %v295 = vpack.c.b16 %v215, %v211
    %v296 = vpack.c.b16 %v216, %v212
    %v297 = vpack.c.b16 %v217, %v213
    %v298 = vpack.c.b16 %v218, %v214
    %v299 = vpack.c.b16 %v223, %v219
    %v300 = vpack.c.b16 %v224, %v220
    %v301 = vpack.c.b16 %v225, %v221
    %v302 = vpack.c.b16 %v226, %v222
    %v303 = vpack.c.b16 %v231, %v227
    %v304 = vpack.c.b16 %v232, %v228
    %v305 = vpack.c.b16 %v233, %v229
    %v306 = vpack.c.b16 %v234, %v230
    %v307 = vpack.c.b16 %v239, %v235
    %v308 = vpack.c.b16 %v240, %v236
    %v309 = vpack.c.b16 %v241, %v237
    %v310 = vpack.c.b16 %v242, %v238
    %v311 = vpack.c.b16 %v247, %v243
    %v312 = vpack.c.b16 %v248, %v244
    %v313 = vpack.c.b16 %v249, %v245
    %v314 = vpack.c.b16 %v250, %v246
    %v315 = vpack.c.b16 %v255, %v251
    %v316 = vpack.c.b16 %v256, %v252
    %v317 = vpack.c.b16 %v257, %v253
    %v318 = vpack.c.b16 %v258, %v254
    %v319 = vpack.c.b16 %v263, %v259
    %v320 = vpack.c.b16 %v264, %v260
    %v321 = vpack.c.b16 %v265, %v261
    %v322 = vpack.c.b16 %v266, %v262
    %v323 = vpack.c.b16 %v271, %v267
    %v324 = vpack.c.b16 %v272, %v268
    %v325 = vpack.c.b16 %v273, %v269
    %v326 = vpack.c.b16 %v274, %v270
    %v327 = vpack.c.b16 %v275, %v275
    %v328 = vpack.c.b16 %v276, %v276
    %v329 = vpack.c.b16 %v277, %v277
    %v330 = vpack.c.b16 %v278, %v278
    %vm379 = vcmask 588800
    %v381 = vsel %vm379, %v68, 0
    %vm383 = vcmask 1043456
    %v385 = vsel %vm383, %v327, 0
    %v388 = vsel %vm383, %v328, 0
    %v391 = vsel %vm383, %v329, 0
    %v394 = vsel %vm383, %v330, 0
    %396 = vmatpush.bf16.msra.mxu0 %v307
    %397 = vmatpush.bf16.msra.mxu0 %v303
    %398 = vmatpush.bf16.msra.mxu0 %v299
    %399 = vmatpush.bf16.msra.mxu0 %v295
    %400 = vmatpush.bf16.msra.mxu0 %v291
    %401 = vmatpush.bf16.msra.mxu0 %v287
    %402 = vmatpush.bf16.msra.mxu0 %v283
    %403 = vmatpush.bf16.msra.mxu0 %v279
    %404 = vmatmul.bf16.gmra.mxu0 %v67
    %v405 = vpop.f32.mrf.mxu0
    %v406 = vadd.f32 %v121, %v405
    %v407 = vpop.f32.mrf.mxu0
    %408 = vdwg.mxu0
    %409 = vmatpush.bf16.msra.mxu0 0
    %410 = vmatpush.bf16.msra.mxu0 0
    %411 = vmatpush.bf16.msra.mxu0 0
    %412 = vmatpush.bf16.msra.mxu0 %v385
    %413 = vmatpush.bf16.msra.mxu0 %v323
    %414 = vmatpush.bf16.msra.mxu0 %v319
    %415 = vmatpush.bf16.msra.mxu0 %v315
    %416 = vmatpush.bf16.msra.mxu0 %v311
    %417 = vmatmul.bf16.gmra.mxu0 %v381
    %v418 = vpop.f32.mrf.mxu0
    %v419 = vadd.f32 %v406, %v418
    %v420 = vpop.f32.mrf.mxu0
    %421 = vdwg.mxu0
    %422 = vmatpush.bf16.msra.mxu0 %v308
    %423 = vmatpush.bf16.msra.mxu0 %v304
    %424 = vmatpush.bf16.msra.mxu0 %v300
    %425 = vmatpush.bf16.msra.mxu0 %v296
    %426 = vmatpush.bf16.msra.mxu0 %v292
    %427 = vmatpush.bf16.msra.mxu0 %v288
    %428 = vmatpush.bf16.msra.mxu0 %v284
    %429 = vmatpush.bf16.msra.mxu0 %v280
    %430 = vmatmul.bf16.gmra.mxu0 %v67
    %v431 = vpop.f32.mrf.mxu0
    %v432 = vadd.f32 %v122, %v431
    %v433 = vpop.f32.mrf.mxu0
    %434 = vdwg.mxu0
    %435 = vmatpush.bf16.msra.mxu0 0
    %436 = vmatpush.bf16.msra.mxu0 0
    %437 = vmatpush.bf16.msra.mxu0 0
    %438 = vmatpush.bf16.msra.mxu0 %v388
    %439 = vmatpush.bf16.msra.mxu0 %v324
    %440 = vmatpush.bf16.msra.mxu0 %v320
    %441 = vmatpush.bf16.msra.mxu0 %v316
    %442 = vmatpush.bf16.msra.mxu0 %v312
    %443 = vmatmul.bf16.gmra.mxu0 %v381
    %v444 = vpop.f32.mrf.mxu0
    %v445 = vadd.f32 %v432, %v444
    %v446 = vpop.f32.mrf.mxu0
    %447 = vdwg.mxu0
    %448 = vmatpush.bf16.msra.mxu0 %v309
    %449 = vmatpush.bf16.msra.mxu0 %v305
    %450 = vmatpush.bf16.msra.mxu0 %v301
    %451 = vmatpush.bf16.msra.mxu0 %v297
    %452 = vmatpush.bf16.msra.mxu0 %v293
    %453 = vmatpush.bf16.msra.mxu0 %v289
    %454 = vmatpush.bf16.msra.mxu0 %v285
    %455 = vmatpush.bf16.msra.mxu0 %v281
    %456 = vmatmul.bf16.gmra.mxu0 %v67
    %v457 = vpop.f32.mrf.mxu0
    %v458 = vadd.f32 %v123, %v457
    %v459 = vpop.f32.mrf.mxu0
    %460 = vdwg.mxu0
    %461 = vmatpush.bf16.msra.mxu0 0
    %462 = vmatpush.bf16.msra.mxu0 0
    %463 = vmatpush.bf16.msra.mxu0 0
    %464 = vmatpush.bf16.msra.mxu0 %v391
    %465 = vmatpush.bf16.msra.mxu0 %v325
    %466 = vmatpush.bf16.msra.mxu0 %v321
    %467 = vmatpush.bf16.msra.mxu0 %v317
    %468 = vmatpush.bf16.msra.mxu0 %v313
    %469 = vmatmul.bf16.gmra.mxu0 %v381
    %v470 = vpop.f32.mrf.mxu0
    %v471 = vadd.f32 %v458, %v470
    %v472 = vpop.f32.mrf.mxu0
    %473 = vdwg.mxu0
    %474 = vmatpush.bf16.msra.mxu0 %v310
    %475 = vmatpush.bf16.msra.mxu0 %v306
    %476 = vmatpush.bf16.msra.mxu0 %v302
    %477 = vmatpush.bf16.msra.mxu0 %v298
    %478 = vmatpush.bf16.msra.mxu0 %v294
    %479 = vmatpush.bf16.msra.mxu0 %v290
    %480 = vmatpush.bf16.msra.mxu0 %v286
    %481 = vmatpush.bf16.msra.mxu0 %v282
    %482 = vmatmul.bf16.gmra.mxu0 %v67
    %v483 = vpop.f32.mrf.mxu0
    %v484 = vadd.f32 %v124, %v483
    %v485 = vpop.f32.mrf.mxu0
    %486 = vdwg.mxu0
    %487 = vmatpush.bf16.msra.mxu0 0
    %488 = vmatpush.bf16.msra.mxu0 0
    %489 = vmatpush.bf16.msra.mxu0 0
    %490 = vmatpush.bf16.msra.mxu0 %v394
    %491 = vmatpush.bf16.msra.mxu0 %v326
    %492 = vmatpush.bf16.msra.mxu0 %v322
    %493 = vmatpush.bf16.msra.mxu0 %v318
    %494 = vmatpush.bf16.msra.mxu0 %v314
    %495 = vmatmul.bf16.gmra.mxu0 %v381
    %v496 = vpop.f32.mrf.mxu0
    %v497 = vadd.f32 %v484, %v496
    %v498 = vpop.f32.mrf.mxu0
    %499 = vdwg.mxu0
    %v500 = vmax.f32 %v419, 0.0
    %v501 = vmax.f32 %v445, 0.0
    %v502 = vmax.f32 %v471, 0.0
    %v503 = vmax.f32 %v497, 0.0
    %v504 = vld [vmem:[#allocation7] sm:$0xff]
    %v505 = vld [vmem:[%s4] sm:$0x3]
    %507 = vset.pattern.permute.xlu0 0
    %508 = vperm.xlu0 %507, %v505
    %v509 = vpop.permute.xlu0 %508
    %512 = vst [vmem:[#allocation1] ss:$4 sm:$0xff] %v504
    %v513 = vld.sshfl [vmem:[#allocation1] sm:$0xff pattern:$0x73625140]
    %v514 = vld.sshfl [vmem:[#allocation1 + $0x8] sm:$0xff pattern:$0x73625140]
    %v515 = vld.sshfl [vmem:[#allocation1 + $0x10] sm:$0xff pattern:$0x73625140]
    %v516 = vld.sshfl [vmem:[#allocation1 + $0x18] sm:$0xff pattern:$0x73625140]
    %521 = vmatpush.xpose.msra.mxu0 0.0
    %522 = vmatpush.xpose.msra.mxu0 0.0
    %523 = vmatpush.xpose.msra.mxu0 0.0
    %524 = vmatpush.xpose.msra.mxu0 0.0
    %525 = vmatpush.xpose.msra.mxu0 0.0
    %526 = vmatpush.xpose.msra.mxu0 0.0
    %527 = vmatpush.xpose.msra.mxu0 0.0
    %528 = vmatpush.xpose.msra.mxu0 0.0
    %529 = vmatpush.xpose.msra.mxu0 0.0
    %530 = vmatpush.xpose.msra.mxu0 0.0
    %531 = vmatpush.xpose.msra.mxu0 0.0
    %532 = vmatpush.xpose.msra.mxu0 0.0
    %533 = vmatpush.xpose.msra.mxu0 0.0
    %534 = vmatpush.xpose.msra.mxu0 0.0
    %535 = vmatpush.xpose.msra.mxu0 0.0
    %536 = vmatpush.xpose.msra.mxu0 %v500
    %537 = vmatmul.f32.gmra.mxu0 %v513
    %v538 = vpop.f32.mrf.mxu0
    %v539 = vadd.f32 %v509, %v538
    %540 = vdwg.mxu0
    %541 = vmatpush.xpose.msra.mxu0 0.0
    %542 = vmatpush.xpose.msra.mxu0 0.0
    %543 = vmatpush.xpose.msra.mxu0 0.0
    %544 = vmatpush.xpose.msra.mxu0 0.0
    %545 = vmatpush.xpose.msra.mxu0 0.0
    %546 = vmatpush.xpose.msra.mxu0 0.0
    %547 = vmatpush.xpose.msra.mxu0 0.0
    %548 = vmatpush.xpose.msra.mxu0 0.0
    %549 = vmatpush.xpose.msra.mxu0 0.0
    %550 = vmatpush.xpose.msra.mxu0 0.0
    %551 = vmatpush.xpose.msra.mxu0 0.0
    %552 = vmatpush.xpose.msra.mxu0 0.0
    %553 = vmatpush.xpose.msra.mxu0 0.0
    %554 = vmatpush.xpose.msra.mxu0 0.0
    %555 = vmatpush.xpose.msra.mxu0 0.0
    %556 = vmatpush.xpose.msra.mxu0 %v501
    %557 = vmatmul.f32.gmra.mxu0 %v514
    %v558 = vpop.f32.mrf.mxu0
    %v559 = vadd.f32 %v539, %v558
    %560 = vdwg.mxu0
    %561 = vmatpush.xpose.msra.mxu0 0.0
    %562 = vmatpush.xpose.msra.mxu0 0.0
    %563 = vmatpush.xpose.msra.mxu0 0.0
    %564 = vmatpush.xpose.msra.mxu0 0.0
    %565 = vmatpush.xpose.msra.mxu0 0.0
    %566 = vmatpush.xpose.msra.mxu0 0.0
    %567 = vmatpush.xpose.msra.mxu0 0.0
    %568 = vmatpush.xpose.msra.mxu0 0.0
    %569 = vmatpush.xpose.msra.mxu0 0.0
    %570 = vmatpush.xpose.msra.mxu0 0.0
    %571 = vmatpush.xpose.msra.mxu0 0.0
    %572 = vmatpush.xpose.msra.mxu0 0.0
    %573 = vmatpush.xpose.msra.mxu0 0.0
    %574 = vmatpush.xpose.msra.mxu0 0.0
    %575 = vmatpush.xpose.msra.mxu0 0.0
    %576 = vmatpush.xpose.msra.mxu0 %v502
    %577 = vmatmul.f32.gmra.mxu0 %v515
    %v578 = vpop.f32.mrf.mxu0
    %v579 = vadd.f32 %v559, %v578
    %580 = vdwg.mxu0
    %581 = vmatpush.xpose.msra.mxu0 0.0
    %582 = vmatpush.xpose.msra.mxu0 0.0
    %583 = vmatpush.xpose.msra.mxu0 0.0
    %584 = vmatpush.xpose.msra.mxu0 0.0
    %585 = vmatpush.xpose.msra.mxu0 0.0
    %586 = vmatpush.xpose.msra.mxu0 0.0
    %587 = vmatpush.xpose.msra.mxu0 0.0
    %588 = vmatpush.xpose.msra.mxu0 0.0
    %589 = vmatpush.xpose.msra.mxu0 0.0
    %590 = vmatpush.xpose.msra.mxu0 0.0
    %591 = vmatpush.xpose.msra.mxu0 0.0
    %592 = vmatpush.xpose.msra.mxu0 0.0
    %593 = vmatpush.xpose.msra.mxu0 0.0
    %594 = vmatpush.xpose.msra.mxu0 0.0
    %595 = vmatpush.xpose.msra.mxu0 0.0
    %596 = vmatpush.xpose.msra.mxu0 %v503
    %597 = vmatmul.f32.gmra.mxu0 %v516
    %v598 = vpop.f32.mrf.mxu0
    %v599 = vadd.f32 %v579, %v598
    %600 = vdwg.mxu0
    %vm601 = vcmask 58368
    %602 = vst.msk [vmem:[#allocation8] sm:$0x3] %vm601, %v599
    // Predicated region
    $region34: #{spec2state_forward.1} parent=1 // pred_check
      _
    $region35: #{spec2state_forward.1} parent=1 // pred_check_branch
      %604 = sbr.rel (0) target = $region37
    $region36: #{spec2state_forward.1} parent=1 // pred_region
      %606 = vsyncadd [#allocation4], 0
      %s608 = sshll.u32 [#allocation8], 4
      %s609 = int_to_ptr.vmem [resolvable:$true] %s608
      %s610 = sshll.u32 %s5, 4
      %s611 = int_to_ptr.hbm [resolvable:$true] %s610
      %613 = dma.vmem_to_hbm [thread:$0]  %s609, 32, %s611, [#allocation4]
    $region37: #{spec2state_forward.1} parent=1 // pred_fallthru
      _
    // Predicated region
    $region38: #{spec2state_forward.1} parent=1 // pred_check
      _
    $region39: #{spec2state_forward.1} parent=1 // pred_check_branch
      %615 = sbr.rel (0) target = $region41
    $region40: #{spec2state_forward.1} parent=1 // pred_region
      %617 = dma.done [#allocation4], 32
    $region41: #{spec2state_forward.1} parent=1 // pred_fallthru
      _
    %618 = vsyncpa [#allocation3], 1
    %619 = vsyncpa [#allocation6], 1
    %620 = vsyncpa [#allocation4], 1

</llo_original>
